<compile_context>
chip_gen: v6e
topology: v6e:2x2x1
jax: 0.10.0
libtpu: 0.0.40
codegen_flags: <defaults>
</compile_context>

<pallas_src>
import functools

import jax
import jax.numpy as jnp
from jax.experimental import pallas as pl
from jax.experimental.pallas import tpu as pltpu


def _bic_kernel(alpha_ref, beta_ref, x_ref, *o_refs, cpt):
    """One grid step = one batch (row) tile covering all tasks.

    x_ref:      (TILE_N, C) block of the input logits (VMEM).
    o_refs[k]:  (TILE_N, cpt) block of task-k output (VMEM).
    alpha/beta: (t,) scalars in SMEM.
    """
    # Static Python loop over tasks: unrolled at trace time, each task writes
    # its own output chunk directly (no post-kernel split / extra HBM pass).
    for k, o_ref in enumerate(o_refs):
        a = alpha_ref[k]  # scalar read from SMEM
        b = beta_ref[k]
        # Static, 128-aligned lane slice of the resident x block.
        o_ref[...] = a * x_ref[:, k * cpt:(k + 1) * cpt] + b


def _choose_tile_n(n, c, itemsize):
    """Pick a batch-tile size: big enough to pipeline, small enough for VMEM."""
    # Minimum sublane count per vreg for this dtype (f32: 8, bf16: 16, int8: 32).
    min_sub = {1: 32, 2: 16, 4: 8}.get(itemsize, 8)
    # Target ~2 MiB per block buffer (x block == sum of output blocks), so
    # double-buffered in + out stays well under v5e's 16 MiB scoped default.
    target_bytes = 2 * 1024 * 1024
    tile = target_bytes // max(1, c * itemsize)
    tile = max(min_sub, tile)
    if tile >= n:
        return n  # full batch in one block (block dim == array dim is allowed)
    return max(min_sub, (tile // min_sub) * min_sub)


@functools.partial(jax.jit, static_argnames=("num_tasks",))
def bicnet_forward_all_chunks(x, alpha, beta, *, num_tasks):
    """Returns a tuple of num_tasks arrays, each (N, C // num_tasks)."""
    n, c = x.shape
    assert c % num_tasks == 0, "logit dim must be divisible by number of tasks"
    cpt = c // num_tasks  # classes per task
    # Lane alignment: per-task chunk width must be a multiple of 128 so the
    # in-kernel slices and per-task stores stay unmasked / tile-aligned.
    assert cpt % 128 == 0, "classes per task must be a multiple of 128"

    itemsize = jnp.dtype(x.dtype).itemsize
    tile_n = _choose_tile_n(n, c, itemsize)
    grid = (pl.cdiv(n, tile_n),)

    out = pl.pallas_call(
        functools.partial(_bic_kernel, cpt=cpt),
        out_shape=tuple(
            jax.ShapeDtypeStruct((n, cpt), x.dtype) for _ in range(num_tasks)
        ),
        grid=grid,
        in_specs=[
            pl.BlockSpec(memory_space=pltpu.MemorySpace.SMEM),   # alpha (t,)
            pl.BlockSpec(memory_space=pltpu.MemorySpace.SMEM),   # beta  (t,)
            pl.BlockSpec((tile_n, c), lambda i: (i, 0)),         # x row tile
        ],
        out_specs=tuple(
            pl.BlockSpec((tile_n, cpt), lambda i: (i, 0))
            for _ in range(num_tasks)
        ),
        compiler_params=pltpu.CompilerParams(
            # Row-tile axis is independent across steps -> shard over v7x's
            # two TensorCores (no-op on v5e/v6e).
            dimension_semantics=("parallel",)
        ),
    )(alpha, beta, x)
    return out


def bicnet_forward_all(x, alpha, beta):
    """Matches BiCNet.forward_all: returns a list of t chunks (split on axis=1)."""
    t = alpha.shape[0]
    return list(bicnet_forward_all_chunks(x, alpha, beta, num_tasks=t))


if __name__ == "__main__":
    key = jax.random.PRNGKey(0)

    # Small shapes consistent with the module: batch=8, t=4 tasks,
    # 128 classes per task -> total logits C = 512 (lane-aligned chunks).
    N, T, CPT = 8, 4, 128
    C = T * CPT

    kx, = jax.random.split(key, 1)
    x = jax.random.normal(kx, (N, C), dtype=jnp.float32)

    # Deterministic parameters per BiCLayer.__init__ (alpha=1, beta=0), then
    # deterministically "calibrated" so the kernel does nontrivial work
    # (as if set_alpha/set_beta had been called after training each head).
    alpha = jnp.ones((T,), jnp.float32) + 0.1 * jnp.arange(T, dtype=jnp.float32)
    beta = jnp.zeros((T,), jnp.float32) + 0.05 * jnp.arange(T, dtype=jnp.float32)

    outs = bicnet_forward_all(x, alpha, beta)
    outs = jax.block_until_ready(outs)

    # Pure-JAX reference of BiCNet.forward_all.
    ref = [alpha[i] * x[:, i * CPT:(i + 1) * CPT] + beta[i] for i in range(T)]
    for o, r in zip(outs, ref):
        assert o.shape == (N, CPT)
        assert jnp.allclose(o, r, atol=1e-6, rtol=1e-6)

    print("KERNEL_OK")
</pallas_src>

<mosaic_0001>
module attributes {stable_mosaic.version = 11 : i64} {
  func.func @_bic_kernel(%arg0: i32, %arg1: memref<4xf32, #tpu.memory_space<smem>>, %arg2: memref<4xf32, #tpu.memory_space<smem>>, %arg3: memref<8x512xf32, #tpu.memory_space<vmem>>, %arg4: memref<8x128xf32, #tpu.memory_space<vmem>>, %arg5: memref<8x128xf32, #tpu.memory_space<vmem>>, %arg6: memref<8x128xf32, #tpu.memory_space<vmem>>, %arg7: memref<8x128xf32, #tpu.memory_space<vmem>>) attributes {dimension_semantics = [#tpu.dimension_semantics<parallel>], iteration_bounds = array<i64: 1>, scalar_prefetch = 0 : i64, scratch_operands = 0 : i64, tpu.core_type = #tpu.core_type<tc>, window_params = [{transform_indices = @transform_0, window_bounds = array<i64: 4>}, {transform_indices = @transform_1, window_bounds = array<i64: 4>}, {transform_indices = @transform_2, window_bounds = array<i64: 8, 512>}, {transform_indices = @transform_3, window_bounds = array<i64: 8, 128>}, {transform_indices = @transform_4, window_bounds = array<i64: 8, 128>}, {transform_indices = @transform_5, window_bounds = array<i64: 8, 128>}, {transform_indices = @transform_6, window_bounds = array<i64: 8, 128>}]} {
    %c0 = arith.constant 0 : index
    %0 = memref.load %arg1[%c0] : memref<4xf32, #tpu.memory_space<smem>>
    %c0_0 = arith.constant 0 : index
    %1 = memref.load %arg2[%c0_0] : memref<4xf32, #tpu.memory_space<smem>>
    %c0_1 = arith.constant 0 : index
    %c0_2 = arith.constant 0 : index
    %2 = vector.load %arg3[%c0_1, %c0_2] : memref<8x512xf32, #tpu.memory_space<vmem>>, vector<8x128xf32>
    %3 = vector.broadcast %0 : f32 to vector<8x128xf32>
    %4 = arith.mulf %3, %2 : vector<8x128xf32>
    %5 = vector.broadcast %1 : f32 to vector<8x128xf32>
    %6 = arith.addf %4, %5 : vector<8x128xf32>
    %c0_3 = arith.constant 0 : index
    %c0_4 = arith.constant 0 : index
    %7 = vector.load %arg4[%c0_3, %c0_4] : memref<8x128xf32, #tpu.memory_space<vmem>>, vector<8x128xf32>
    tpu.vector_store %arg4[%c0_3, %c0_4], %6 {strides = array<i32>} : memref<8x128xf32, #tpu.memory_space<vmem>>, vector<8x128xf32>,
    %c1 = arith.constant 1 : index
    %8 = memref.load %arg1[%c1] : memref<4xf32, #tpu.memory_space<smem>>
    %c1_5 = arith.constant 1 : index
    %9 = memref.load %arg2[%c1_5] : memref<4xf32, #tpu.memory_space<smem>>
    %c0_6 = arith.constant 0 : index
    %c128 = arith.constant 128 : index
    %10 = vector.load %arg3[%c0_6, %c128] : memref<8x512xf32, #tpu.memory_space<vmem>>, vector<8x128xf32>
    %11 = vector.broadcast %8 : f32 to vector<8x128xf32>
    %12 = arith.mulf %11, %10 : vector<8x128xf32>
    %13 = vector.broadcast %9 : f32 to vector<8x128xf32>
    %14 = arith.addf %12, %13 : vector<8x128xf32>
    %c0_7 = arith.constant 0 : index
    %c0_8 = arith.constant 0 : index
    %15 = vector.load %arg5[%c0_7, %c0_8] : memref<8x128xf32, #tpu.memory_space<vmem>>, vector<8x128xf32>
    tpu.vector_store %arg5[%c0_7, %c0_8], %14 {strides = array<i32>} : memref<8x128xf32, #tpu.memory_space<vmem>>, vector<8x128xf32>,
    %c2 = arith.constant 2 : index
    %16 = memref.load %arg1[%c2] : memref<4xf32, #tpu.memory_space<smem>>
    %c2_9 = arith.constant 2 : index
    %17 = memref.load %arg2[%c2_9] : memref<4xf32, #tpu.memory_space<smem>>
    %c0_10 = arith.constant 0 : index
    %c256 = arith.constant 256 : index
    %18 = vector.load %arg3[%c0_10, %c256] : memref<8x512xf32, #tpu.memory_space<vmem>>, vector<8x128xf32>
    %19 = vector.broadcast %16 : f32 to vector<8x128xf32>
    %20 = arith.mulf %19, %18 : vector<8x128xf32>
    %21 = vector.broadcast %17 : f32 to vector<8x128xf32>
    %22 = arith.addf %20, %21 : vector<8x128xf32>
    %c0_11 = arith.constant 0 : index
    %c0_12 = arith.constant 0 : index
    %23 = vector.load %arg6[%c0_11, %c0_12] : memref<8x128xf32, #tpu.memory_space<vmem>>, vector<8x128xf32>
    tpu.vector_store %arg6[%c0_11, %c0_12], %22 {strides = array<i32>} : memref<8x128xf32, #tpu.memory_space<vmem>>, vector<8x128xf32>,
    %c3 = arith.constant 3 : index
    %24 = memref.load %arg1[%c3] : memref<4xf32, #tpu.memory_space<smem>>
    %c3_13 = arith.constant 3 : index
    %25 = memref.load %arg2[%c3_13] : memref<4xf32, #tpu.memory_space<smem>>
    %c0_14 = arith.constant 0 : index
    %c384 = arith.constant 384 : index
    %26 = vector.load %arg3[%c0_14, %c384] : memref<8x512xf32, #tpu.memory_space<vmem>>, vector<8x128xf32>
    %27 = vector.broadcast %24 : f32 to vector<8x128xf32>
    %28 = arith.mulf %27, %26 : vector<8x128xf32>
    %29 = vector.broadcast %25 : f32 to vector<8x128xf32>
    %30 = arith.addf %28, %29 : vector<8x128xf32>
    %c0_15 = arith.constant 0 : index
    %c0_16 = arith.constant 0 : index
    %31 = vector.load %arg7[%c0_15, %c0_16] : memref<8x128xf32, #tpu.memory_space<vmem>>, vector<8x128xf32>
    tpu.vector_store %arg7[%c0_15, %c0_16], %30 {strides = array<i32>} : memref<8x128xf32, #tpu.memory_space<vmem>>, vector<8x128xf32>,
    return
  }
  func.func @transform_0(%arg0: i32) -> i32 {
    %c0_i32 = arith.constant 0 : i32
    %c0_i32_0 = arith.constant 0 : i32
    return %c0_i32 : i32
  }
  func.func @transform_1(%arg0: i32) -> i32 {
    %c0_i32 = arith.constant 0 : i32
    %c0_i32_0 = arith.constant 0 : i32
    return %c0_i32 : i32
  }
  func.func @transform_2(%arg0: i32) -> (i32, i32) {
    %c0_i32 = arith.constant 0 : i32
    %c0_i32_0 = arith.constant 0 : i32
    return %arg0, %c0_i32 : i32, i32
  }
  func.func @transform_3(%arg0: i32) -> (i32, i32) {
    %c0_i32 = arith.constant 0 : i32
    %c0_i32_0 = arith.constant 0 : i32
    return %arg0, %c0_i32 : i32, i32
  }
  func.func @transform_4(%arg0: i32) -> (i32, i32) {
    %c0_i32 = arith.constant 0 : i32
    %c0_i32_0 = arith.constant 0 : i32
    return %arg0, %c0_i32 : i32, i32
  }
  func.func @transform_5(%arg0: i32) -> (i32, i32) {
    %c0_i32 = arith.constant 0 : i32
    %c0_i32_0 = arith.constant 0 : i32
    return %arg0, %c0_i32 : i32, i32
  }
  func.func @transform_6(%arg0: i32) -> (i32, i32) {
    %c0_i32 = arith.constant 0 : i32
    %c0_i32_0 = arith.constant 0 : i32
    return %arg0, %c0_i32 : i32, i32
  }
}

</mosaic_0001>

<llo_original>
// kernel: bicnet_forward_all_chunks.1
$region0: #{bicnet_forward_all_chunks.1}
  #allocation0 [shape = 'u32[]', space=smem, size = 0x4, offset = 0x4, fixed_abs, tag = 'smem constant byte address 0x4 - core index']
  #allocation1 [shape = 'u32[144,128]{1,0:T(1,128)}', space=vmem, size = 0x12000, scoped, tag = 'internal scratch']
  %s0 = inlined_call_operand.vmem [shape: f32[4], index: 0, kind: input, shape index: {}]
  %s1 = inlined_call_operand.vmem [shape: f32[4], index: 1, kind: input, shape index: {}]
  %s2 = inlined_call_operand.hbm [shape: f32[8,512], index: 2, kind: input, shape index: {}]
  %s3 = inlined_call_operand.hbm [shape: f32[8,128], index: 3, kind: output, shape index: {0}]
  %s4 = inlined_call_operand.hbm [shape: f32[8,128], index: 4, kind: output, shape index: {1}]
  %s5 = inlined_call_operand.hbm [shape: f32[8,128], index: 5, kind: output, shape index: {2}]
  %s6 = inlined_call_operand.hbm [shape: f32[8,128], index: 6, kind: output, shape index: {3}]
  %7 = xla_tuple %s3, %s4, %s5, %s6
  %s8 = sld [smem:[#allocation0]]
  $region58: #{bicnet_forward_all_chunks.1} parent=0
    _
  %s10 = ssub.s32 1, %s8
  %s11 = scalar_select 0, %s10, %s8
  $region1: #{bicnet_forward_all_chunks.1} parent=0
    #allocation2 [shape = 'u8[512]{0}', space=smem, size = 0x200, scoped, tag = 'input window, operand 0, single buffered']
    #allocation3 [shape = 's32[1]{0}', space=sflag, size = 0x4, scoped, tag = 'scoped memory for bicnet_forward_all_chunks.1']
    #allocation4 [shape = 's32[1]{0}', space=sflag, size = 0x4, scoped, tag = 'scoped memory for bicnet_forward_all_chunks.1']
    #allocation5 [shape = 's32[1]{0}', space=sflag, size = 0x4, scoped, tag = 'scoped memory for bicnet_forward_all_chunks.1']
    #allocation6 [shape = 'u8[512]{0}', space=smem, size = 0x200, scoped, tag = 'input window, operand 1, single buffered']
    #allocation7 [shape = 's32[1]{0}', space=sflag, size = 0x4, scoped, tag = 'scoped memory for bicnet_forward_all_chunks.1']
    #allocation8 [shape = 'u8[16384]{0}', space=vmem, size = 0x4000, scoped, tag = 'input window, operand 2, single buffered']
    #allocation9 [shape = 'u8[4096]{0}', space=vmem, size = 0x1000, scoped, tag = 'output window, operand 0, single buffered']
    #allocation10 [shape = 'u8[4096]{0}', space=vmem, size = 0x1000, scoped, tag = 'output window, operand 1, single buffered']
    #allocation11 [shape = 's32[1]{0}', space=sflag, size = 0x4, scoped, tag = 'scoped memory for bicnet_forward_all_chunks.1']
    #allocation12 [shape = 'u8[4096]{0}', space=vmem, size = 0x1000, scoped, tag = 'output window, operand 2, single buffered']
    #allocation13 [shape = 'u8[4096]{0}', space=vmem, size = 0x1000, scoped, tag = 'output window, operand 3, single buffered']
    #allocation14 [shape = 's32[1]{0}', space=sflag, size = 0x4, scoped, tag = 'scoped memory for bicnet_forward_all_chunks.1']
    %12 = vsyncpa [#allocation5], 0
    %13 = vsyncpa [#allocation7], 0
    %14 = vsyncpa [#allocation3], 0
    %15 = vsyncpa [#allocation4], 0
    %16 = vsyncpa [#allocation11], 0
    %17 = vsyncpa [#allocation14], 0
    // Predicated region
    $region2: #{bicnet_forward_all_chunks.1} parent=1 // pred_check
      _
    $region3: #{bicnet_forward_all_chunks.1} parent=1 // pred_check_branch
      %19 = sbr.rel (0) target = $region5
    $region4: #{bicnet_forward_all_chunks.1} parent=1 // pred_region
      %s21 = ssub.s32 16, 16
      %22 = vsyncadd [#allocation5], %s21
      %s24 = sshll.u32 %s0, 4
      %s25 = int_to_ptr.vmem [resolvable:$true] %s24
      %27 = dma.vmem_to_smem %s25, 16, [#allocation2], [#allocation5]
    $region5: #{bicnet_forward_all_chunks.1} parent=1 // pred_fallthru
      _
    // Predicated region
    $region6: #{bicnet_forward_all_chunks.1} parent=1 // pred_check
      _
    $region7: #{bicnet_forward_all_chunks.1} parent=1 // pred_check_branch
      %29 = sbr.rel (0) target = $region9
    $region8: #{bicnet_forward_all_chunks.1} parent=1 // pred_region
      %s31 = ssub.s32 16, 16
      %32 = vsyncadd [#allocation7], %s31
      %s34 = sshll.u32 %s1, 4
      %s35 = int_to_ptr.vmem [resolvable:$true] %s34
      %37 = dma.vmem_to_smem %s35, 16, [#allocation6], [#allocation7]
    $region9: #{bicnet_forward_all_chunks.1} parent=1 // pred_fallthru
      _
    // Predicated region
    $region10: #{bicnet_forward_all_chunks.1} parent=1 // pred_check
      _
    $region11: #{bicnet_forward_all_chunks.1} parent=1 // pred_check_branch
      %39 = sbr.rel (0) target = $region13
    $region12: #{bicnet_forward_all_chunks.1} parent=1 // pred_region
      %s41 = ssub.s32 512, 512
      %42 = vsyncadd [#allocation3], %s41
      %s44 = sshll.u32 [#allocation8], 4
      %s45 = int_to_ptr.vmem [resolvable:$true] %s44
      %47 = dma.hbm_to_vmem [thread:$0]  %s2, 512, %s45, [#allocation3]
    $region13: #{bicnet_forward_all_chunks.1} parent=1 // pred_fallthru
      _
    // Predicated region
    $region14: #{bicnet_forward_all_chunks.1} parent=1 // pred_check
      _
    $region15: #{bicnet_forward_all_chunks.1} parent=1 // pred_check_branch
      %49 = sbr.rel (0) target = $region17
    $region16: #{bicnet_forward_all_chunks.1} parent=1 // pred_region
      %50 = dma.done [#allocation5], 16
    $region17: #{bicnet_forward_all_chunks.1} parent=1 // pred_fallthru
      _
    // Predicated region
    $region18: #{bicnet_forward_all_chunks.1} parent=1 // pred_check
      _
    $region19: #{bicnet_forward_all_chunks.1} parent=1 // pred_check_branch
      %52 = sbr.rel (0) target = $region21
    $region20: #{bicnet_forward_all_chunks.1} parent=1 // pred_region
      %53 = dma.done [#allocation7], 16
    $region21: #{bicnet_forward_all_chunks.1} parent=1 // pred_fallthru
      _
    // Predicated region
    $region22: #{bicnet_forward_all_chunks.1} parent=1 // pred_check
      _
    $region23: #{bicnet_forward_all_chunks.1} parent=1 // pred_check_branch
      %55 = sbr.rel (0) target = $region25
    $region24: #{bicnet_forward_all_chunks.1} parent=1 // pred_region
      %56 = dma.done [#allocation3], 512
    $region25: #{bicnet_forward_all_chunks.1} parent=1 // pred_fallthru
      _
    %57 = sfence
    %s58 = sld [smem:[#allocation2]]
    %s59 = sld [smem:[#allocation6]]
    %v60 = vld [vmem:[#allocation8] sm:$0xff]
    %v61 = vstv %s58
    %v62 = vmul.f32 %v61, %v60
    %v63 = vstv %s59
    %v64 = vadd.f32 %v62, %v63
    %65 = vst [vmem:[#allocation9] sm:$0xff] %v64
    %s66 = sld [smem:[#allocation2 + $0x1]]
    %s67 = sld [smem:[#allocation6 + $0x1]]
    %v68 = vld [vmem:[#allocation8 + $0x8] sm:$0xff]
    %v69 = vstv %s66
    %v70 = vmul.f32 %v69, %v68
    %v71 = vstv %s67
    %v72 = vadd.f32 %v70, %v71
    %73 = vst [vmem:[#allocation10] sm:$0xff] %v72
    %s74 = sld [smem:[#allocation2 + $0x2]]
    %s75 = sld [smem:[#allocation6 + $0x2]]
    %v76 = vld [vmem:[#allocation8 + $0x10] sm:$0xff]
    %v77 = vstv %s74
    %v78 = vmul.f32 %v77, %v76
    %v79 = vstv %s75
    %v80 = vadd.f32 %v78, %v79
    %81 = vst [vmem:[#allocation12] sm:$0xff] %v80
    %s82 = sld [smem:[#allocation2 + $0x3]]
    %s83 = sld [smem:[#allocation6 + $0x3]]
    %v84 = vld [vmem:[#allocation8 + $0x18] sm:$0xff]
    %v85 = vstv %s82
    %v86 = vmul.f32 %v85, %v84
    %v87 = vstv %s83
    %v88 = vadd.f32 %v86, %v87
    %89 = vst [vmem:[#allocation13] sm:$0xff] %v88
    // Predicated region
    $region26: #{bicnet_forward_all_chunks.1} parent=1 // pred_check
      _
    $region27: #{bicnet_forward_all_chunks.1} parent=1 // pred_check_branch
      %91 = sbr.rel (0) target = $region29
    $region28: #{bicnet_forward_all_chunks.1} parent=1 // pred_region
      %s93 = ssub.s32 128, 128
      %94 = vsyncadd [#allocation4], %s93
      %s96 = sshll.u32 [#allocation9], 4
      %s97 = int_to_ptr.vmem [resolvable:$true] %s96
      %99 = dma.vmem_to_hbm [thread:$0]  %s97, 128, %s3, [#allocation4]
    $region29: #{bicnet_forward_all_chunks.1} parent=1 // pred_fallthru
      _
    // Predicated region
    $region30: #{bicnet_forward_all_chunks.1} parent=1 // pred_check
      _
    $region31: #{bicnet_forward_all_chunks.1} parent=1 // pred_check_branch
      %101 = sbr.rel (0) target = $region33
    $region32: #{bicnet_forward_all_chunks.1} parent=1 // pred_region
      %s103 = ssub.s32 128, 128
      %104 = vsyncadd [#allocation11], %s103
      %s106 = sshll.u32 [#allocation10], 4
      %s107 = int_to_ptr.vmem [resolvable:$true] %s106
      %109 = dma.vmem_to_hbm [thread:$0]  %s107, 128, %s4, [#allocation11]
    $region33: #{bicnet_forward_all_chunks.1} parent=1 // pred_fallthru
      _
    // Predicated region
    $region34: #{bicnet_forward_all_chunks.1} parent=1 // pred_check
      _
    $region35: #{bicnet_forward_all_chunks.1} parent=1 // pred_check_branch
      %111 = sbr.rel (0) target = $region37
    $region36: #{bicnet_forward_all_chunks.1} parent=1 // pred_region
      %s113 = ssub.s32 128, 128
      %114 = vsyncadd [#allocation11], %s113
      %s116 = sshll.u32 [#allocation12], 4
      %s117 = int_to_ptr.vmem [resolvable:$true] %s116
      %119 = dma.vmem_to_hbm [thread:$0]  %s117, 128, %s5, [#allocation11]
    $region37: #{bicnet_forward_all_chunks.1} parent=1 // pred_fallthru
      _
    // Predicated region
    $region38: #{bicnet_forward_all_chunks.1} parent=1 // pred_check
      _
    $region39: #{bicnet_forward_all_chunks.1} parent=1 // pred_check_branch
      %121 = sbr.rel (0) target = $region41
    $region40: #{bicnet_forward_all_chunks.1} parent=1 // pred_region
      %s123 = ssub.s32 128, 128
      %124 = vsyncadd [#allocation14], %s123
      %s126 = sshll.u32 [#allocation13], 4
      %s127 = int_to_ptr.vmem [resolvable:$true] %s126
      %129 = dma.vmem_to_hbm [thread:$0]  %s127, 128, %s6, [#allocation14]
    $region41: #{bicnet_forward_all_chunks.1} parent=1 // pred_fallthru
      _
    // Predicated region
    $region42: #{bicnet_forward_all_chunks.1} parent=1 // pred_check
      _
    $region43: #{bicnet_forward_all_chunks.1} parent=1 // pred_check_branch
      %131 = sbr.rel (0) target = $region45
    $region44: #{bicnet_forward_all_chunks.1} parent=1 // pred_region
      %132 = dma.done [#allocation4], 128
    $region45: #{bicnet_forward_all_chunks.1} parent=1 // pred_fallthru
      _
    // Predicated region
    $region46: #{bicnet_forward_all_chunks.1} parent=1 // pred_check
      _
    $region47: #{bicnet_forward_all_chunks.1} parent=1 // pred_check_branch
      %134 = sbr.rel (0) target = $region49
    $region48: #{bicnet_forward_all_chunks.1} parent=1 // pred_region
      %135 = dma.done [#allocation11], 128
    $region49: #{bicnet_forward_all_chunks.1} parent=1 // pred_fallthru
      _
    // Predicated region
    $region50: #{bicnet_forward_all_chunks.1} parent=1 // pred_check
      _
    $region51: #{bicnet_forward_all_chunks.1} parent=1 // pred_check_branch
      %137 = sbr.rel (0) target = $region53
    $region52: #{bicnet_forward_all_chunks.1} parent=1 // pred_region
      %138 = dma.done [#allocation11], 128
    $region53: #{bicnet_forward_all_chunks.1} parent=1 // pred_fallthru
      _
    // Predicated region
    $region54: #{bicnet_forward_all_chunks.1} parent=1 // pred_check
      _
    $region55: #{bicnet_forward_all_chunks.1} parent=1 // pred_check_branch
      %140 = sbr.rel (0) target = $region57
    $region56: #{bicnet_forward_all_chunks.1} parent=1 // pred_region
      %141 = dma.done [#allocation14], 128
    $region57: #{bicnet_forward_all_chunks.1} parent=1 // pred_fallthru
      _
    %142 = vsyncpa [#allocation3], 1
    %143 = vsyncpa [#allocation4], 1
    %144 = vsyncpa [#allocation11], 1
    %145 = vsyncpa [#allocation14], 1
    %146 = vsyncpa [#allocation5], 1
    %147 = vsyncpa [#allocation7], 1

</llo_original>
